<compile_context>
chip_gen: v7x
topology: tpu7x:2x2x1
jax: 0.10.0
libtpu: 0.0.40
codegen_flags: <defaults>
</compile_context>

<pallas_src>
import functools
import math
import numpy as np
import jax
import jax.numpy as jnp
from jax import lax
from jax.experimental import pallas as pl
from jax.experimental.pallas import tpu as pltpu

NEG_INF = -1e30  # finite mask value: avoids (-inf) - (-inf) = NaN in online softmax


# ------------------------- small helpers -------------------------

def _round_up(x, m):
    return (x + m - 1) // m * m


def _pick_tile(full, target, mult):
    """Largest tile <= target that divides `full` and is a multiple of `mult`;
    falls back to the full dimension (always a legal block shape)."""
    if full <= target:
        return full
    t = (target // mult) * mult
    while t >= mult:
        if full % t == 0:
            return t
        t -= mult
    return full


@functools.lru_cache(maxsize=None)
def _tpu_defaults():
    """Generation-aware VMEM limit and tile-size targets."""
    try:
        kind = jax.devices()[0].device_kind.lower()
    except Exception:
        kind = ""
    big_vmem = ("v5" in kind) or ("v6" in kind)          # 128 MiB physical VMEM
    return {
        "vmem": (100 if big_vmem else 48) * 1024 * 1024,  # v7x: 64 MiB physical
        "row_t": 256 if big_vmem else 128,                # row-tile target
        "col_t": 1024 if big_vmem else 512,               # K/N-tile target
        "kv_t": 128 if "v5" in kind else 256,             # MXU 4x128^2 vs 2x256^2
    }


def _cparams(*sem):
    return pltpu.CompilerParams(dimension_semantics=sem,
                                vmem_limit_bytes=_tpu_defaults()["vmem"])


def _ffn_hidden_tile(hidden):
    return _pick_tile(hidden, _tpu_defaults()["col_t"], 128)


# ------------------------- kernel 1: rmsnorm + QKV + RoPE -------------------------

def _norm_qkv_rope_kernel(x_ref, nw_ref, w_ref, cc_ref, ss_ref, qkv_ref, xn_sc, *,
                          head_dim, rope_cols, tn, eps):
    j = pl.program_id(1)

    @pl.when(j == 0)
    def _():
        xf = x_ref[...].astype(jnp.float32)
        ms = jnp.mean(xf * xf, axis=-1, keepdims=True)
        xn_sc[...] = ((xf * lax.rsqrt(ms + eps)) * nw_ref[...]).astype(xn_sc.dtype)

    y = jnp.dot(xn_sc[...], w_ref[...], preferred_element_type=jnp.float32)  # (tm, tn)

    # RoPE on de-interleaved ([even|odd] per head) columns:
    #   out = y * [c|c] + swap_halves_per_head(y) * [-s|s]
    # The column mask keeps V columns (>= rope_cols) un-rotated, so a single
    # lane-dense store covers Q / K / V tiles uniformly.
    half = head_dim // 2
    hpt = tn // head_dim
    cc = cc_ref[...]                      # (tm, head_dim) = [cos | cos]
    ss = ss_ref[...]                      # (tm, head_dim) = [-sin | sin]
    swapped_parts = []
    for h in range(hpt):
        a = y[:, h * head_dim:h * head_dim + half]
        b = y[:, h * head_dim + half:(h + 1) * head_dim]
        swapped_parts.append(b)
        swapped_parts.append(a)
    swapped = jnp.concatenate(swapped_parts, axis=-1)
    ccf = jnp.concatenate([cc] * hpt, axis=-1) if hpt > 1 else cc
    ssf = jnp.concatenate([ss] * hpt, axis=-1) if hpt > 1 else ss
    rot = y * ccf + swapped * ssf
    col = lax.broadcasted_iota(jnp.int32, y.shape, 1) + j * tn
    out = jnp.where(col < rope_cols, rot, y)
    qkv_ref[...] = out.astype(qkv_ref.dtype)


def norm_qkv_rope(x, norm_w, wqkv, cc, ss, cfg):
    Tp, dim = x.shape
    H, KVH, Dh = cfg["n_heads"], cfg["n_kv_heads"], cfg["head_dim"]
    dtot = (H + 2 * KVH) * Dh
    d = _tpu_defaults()
    tm = _pick_tile(Tp, d["row_t"], 16)
    mult = Dh * 128 // math.gcd(Dh, 128)          # head-aligned and 128-aligned
    tn = _pick_tile(dtot, 512, mult)              # weight streamed, never fully resident
    kern = functools.partial(_norm_qkv_rope_kernel, head_dim=Dh,
                             rope_cols=(H + KVH) * Dh, tn=tn, eps=cfg["norm_eps"])
    return pl.pallas_call(
        kern,
        out_shape=jax.ShapeDtypeStruct((Tp, dtot), jnp.bfloat16),
        grid=(Tp // tm, dtot // tn),
        in_specs=[
            pl.BlockSpec((tm, dim), lambda i, j: (i, 0)),
            pl.BlockSpec((1, dim), lambda i, j: (0, 0)),
            pl.BlockSpec((dim, tn), lambda i, j: (0, j)),
            pl.BlockSpec((tm, Dh), lambda i, j: (i, 0)),
            pl.BlockSpec((tm, Dh), lambda i, j: (i, 0)),
        ],
        out_specs=pl.BlockSpec((tm, tn), lambda i, j: (i, j)),
        scratch_shapes=[pltpu.VMEM((tm, dim), jnp.bfloat16)],
        compiler_params=_cparams("parallel", "arbitrary"),
    )(x, norm_w, wqkv, cc, ss)


# ------------------------- kernel 2: flash attention (GQA, block-diag causal) -------------------------

def _flash_attn_kernel(ss_smem, ss_col_ref, q_ref, k_ref, v_ref, o_ref,
                       m_sc, l_sc, acc_sc, *, n_heads, n_kv_heads, head_dim, tq, tk):
    qi = pl.program_id(0)
    kj = pl.program_id(1)
    rep = n_heads // n_kv_heads

    @pl.when(kj == 0)
    def _():
        m_sc[...] = jnp.full(m_sc.shape, NEG_INF, m_sc.dtype)
        l_sc[...] = jnp.zeros(l_sc.shape, l_sc.dtype)
        acc_sc[...] = jnp.zeros(acc_sc.shape, acc_sc.dtype)

    q_start = qi * tq
    kv_start = kj * tk
    seg_lo_first = ss_smem[q_start]                 # segment start of first query row
    seg_lo_last = ss_smem[q_start + tq - 1]         # segment start of last query row
    skip = jnp.logical_or(kv_start > q_start + tq - 1,        # above causal diagonal
                          kv_start + tk - 1 < seg_lo_first)   # entirely earlier segment
    # fully-unmasked interior tile: strictly below the diagonal for every q row
    # and entirely inside every q row's segment.
    full = jnp.logical_and(kv_start + tk - 1 <= q_start,
                           kv_start >= seg_lo_last)

    def tile_body(use_mask):
        qb = q_ref[...]
        kb = k_ref[...]
        vb = v_ref[...]
        if use_mask:
            qpos = lax.broadcasted_iota(jnp.int32, (tq, tk), 0) + q_start
            kpos = lax.broadcasted_iota(jnp.int32, (tq, tk), 1) + kv_start
            mask = jnp.logical_and(kpos <= qpos, kpos >= ss_col_ref[...])
        for h in range(n_heads):                    # GQA: query head -> kv head
            g = h // rep
            qh = qb[:, h * head_dim:(h + 1) * head_dim]
            kh = kb[:, g * head_dim:(g + 1) * head_dim]
            vh = vb[:, g * head_dim:(g + 1) * head_dim]
            # 1/sqrt(head_dim) is folded into wq at pack time (no per-tile scale).
            sc = lax.dot_general(qh, kh, (((1,), (1,)), ((), ())),
                                 preferred_element_type=jnp.float32)
            if use_mask:
                sc = jnp.where(mask, sc, NEG_INF)
            m_prev = m_sc[h]
            m_new = jnp.maximum(m_prev, jnp.max(sc, axis=-1, keepdims=True))
            alpha = jnp.exp(m_prev - m_new)
            p = jnp.exp(sc - m_new)
            l_sc[h] = alpha * l_sc[h] + jnp.sum(p, axis=-1, keepdims=True)
            acc_sc[h] = alpha * acc_sc[h] + jnp.dot(
                p.astype(jnp.bfloat16), vh, preferred_element_type=jnp.float32)
            m_sc[h] = m_new

    @pl.when(full)
    def _():
        tile_body(False)                            # fast path: no mask / select

    @pl.when(jnp.logical_and(jnp.logical_not(skip), jnp.logical_not(full)))
    def _():
        tile_body(True)

    @pl.when(kj == pl.num_programs(1) - 1)
    def _():
        pieces = []
        for h in range(n_heads):
            inv = pl.reciprocal(l_sc[h], approx=True)
            pieces.append(acc_sc[h] * inv)
        o_ref[...] = jnp.concatenate(pieces, axis=-1).astype(o_ref.dtype)  # one lane-dense store


def flash_attention(qkv, sstart, sstart_col, cfg):
    Tp = qkv.shape[0]
    H, KVH, Dh = cfg["n_heads"], cfg["n_kv_heads"], cfg["head_dim"]
    dq, dkv = H * Dh, KVH * Dh
    rep = H // KVH
    d = _tpu_defaults()
    tq = _pick_tile(Tp, d["row_t"], 16)
    tk = _pick_tile(Tp, d["kv_t"], 16)

    # Read Q/K/V directly from the fused qkv activation when the section widths
    # are 128-lane aligned; otherwise split once in XLA (tiny-shape fallback).
    fused_ok = (dq % 128 == 0) and (dkv % 128 == 0)
    if fused_ok:
        q_arr, k_arr, v_arr = qkv, qkv, qkv
        qcol, kcol, vcol = 0, rep, rep + 1
    else:
        q_arr = qkv[:, :dq]
        k_arr = qkv[:, dq:dq + dkv]
        v_arr = qkv[:, dq + dkv:]
        qcol, kcol, vcol = 0, 0, 0

    def kv_map(col):
        # Splash-style clamp: skipped (upper-triangle / earlier-segment) steps map
        # to an already-resident block index, so no K/V DMA is issued for them.
        def f(i, j, ss):
            q_start = i * tq
            lo = ss[q_start] // tk
            hi = (q_start + tq - 1) // tk
            jj = jnp.minimum(jnp.maximum(j, lo), hi)
            return (jj, col)
        return f

    kern = functools.partial(_flash_attn_kernel, n_heads=H, n_kv_heads=KVH,
                             head_dim=Dh, tq=tq, tk=tk)
    grid_spec = pltpu.PrefetchScalarGridSpec(
        num_scalar_prefetch=1,
        grid=(Tp // tq, Tp // tk),
        in_specs=[
            pl.BlockSpec((tq, 1), lambda i, j, ss: (i, 0)),
            pl.BlockSpec((tq, dq), lambda i, j, ss: (i, qcol)),
            pl.BlockSpec((tk, dkv), kv_map(kcol)),
            pl.BlockSpec((tk, dkv), kv_map(vcol)),
        ],
        out_specs=pl.BlockSpec((tq, dq), lambda i, j, ss: (i, 0)),
        scratch_shapes=[
            pltpu.VMEM((H, tq, 1), jnp.float32),    # running max
            pltpu.VMEM((H, tq, 1), jnp.float32),    # running denom
            pltpu.VMEM((H, tq, Dh), jnp.float32),   # running numerator
        ],
    )
    # TODO(synk): a kv-head-group grid axis (parallel) would feed both v7x cores
    # when Tp//tq is small and shrink the unrolled head loop.
    return pl.pallas_call(
        kern,
        out_shape=jax.ShapeDtypeStruct((Tp, dq), jnp.bfloat16),
        grid_spec=grid_spec,
        compiler_params=_cparams("parallel", "arbitrary"),
    )(sstart, sstart_col, q_arr, k_arr, v_arr)


# ------------------------- kernel 3: WO projection + residual -------------------------

def _wo_residual_kernel(y_ref, w_ref, r_ref, o_ref, acc_ref):
    kk = pl.program_id(1)

    @pl.when(kk == 0)
    def _():
        acc_ref[...] = r_ref[...].astype(jnp.float32)

    acc_ref[...] += jnp.dot(y_ref[...], w_ref[...],
                            preferred_element_type=jnp.float32)

    @pl.when(kk == pl.num_programs(1) - 1)
    def _():
        o_ref[...] = acc_ref[...].astype(o_ref.dtype)


def wo_residual(attn_out, wo, resid):
    Tp, dq = attn_out.shape
    dim = wo.shape[1]
    d = _tpu_defaults()
    tm = _pick_tile(Tp, d["row_t"], 16)
    tk = _pick_tile(dq, d["col_t"], 128)
    return pl.pallas_call(
        _wo_residual_kernel,
        out_shape=jax.ShapeDtypeStruct((Tp, dim), resid.dtype),
        grid=(Tp // tm, dq // tk),
        in_specs=[
            pl.BlockSpec((tm, tk), lambda i, kk: (i, kk)),
            pl.BlockSpec((tk, dim), lambda i, kk: (kk, 0)),
            pl.BlockSpec((tm, dim), lambda i, kk: (i, 0)),
        ],
        out_specs=pl.BlockSpec((tm, dim), lambda i, kk: (i, 0)),
        scratch_shapes=[pltpu.VMEM((tm, dim), jnp.float32)],
        compiler_params=_cparams("parallel", "arbitrary"),
    )(attn_out, wo, resid)


# ------------------------- kernel 4: rmsnorm + SwiGLU FFN + residual -------------------------

def _norm_ffn_residual_kernel(h_ref, nw_ref, w13_ref, w2_ref, o_ref,
                              xn_sc, acc_ref, *, th, eps):
    kk = pl.program_id(1)

    @pl.when(kk == 0)
    def _():
        xf = h_ref[...].astype(jnp.float32)
        ms = jnp.mean(xf * xf, axis=-1, keepdims=True)
        xn_sc[...] = ((xf * lax.rsqrt(ms + eps)) * nw_ref[...]).astype(xn_sc.dtype)
        acc_ref[...] = xf                           # residual pre-loaded into accumulator

    # w13 is packed [w1_tile | w3_tile] per hidden tile -> one MXU matmul per step.
    h13 = jnp.dot(xn_sc[...], w13_ref[...], preferred_element_type=jnp.float32)
    h1 = h13[:, :th]
    h3 = h13[:, th:]
    g = h1 * (1.0 / (1.0 + jnp.exp(-h1))) * h3      # silu(x@w1) * (x@w3)
    acc_ref[...] += jnp.dot(g.astype(jnp.bfloat16), w2_ref[...],
                            preferred_element_type=jnp.float32)

    @pl.when(kk == pl.num_programs(1) - 1)
    def _():
        o_ref[...] = acc_ref[...].astype(o_ref.dtype)


def norm_ffn_residual(h, norm_w, w13, w2, eps):
    Tp, dim = h.shape
    hidden = w2.shape[0]
    th = _ffn_hidden_tile(hidden)
    d = _tpu_defaults()
    tm = _pick_tile(Tp, d["row_t"], 16)
    return pl.pallas_call(
        functools.partial(_norm_ffn_residual_kernel, th=th, eps=eps),
        out_shape=jax.ShapeDtypeStruct((Tp, dim), h.dtype),
        grid=(Tp // tm, hidden // th),
        in_specs=[
            pl.BlockSpec((tm, dim), lambda i, kk: (i, 0)),
            pl.BlockSpec((1, dim), lambda i, kk: (0, 0)),
            pl.BlockSpec((dim, 2 * th), lambda i, kk: (0, kk)),
            pl.BlockSpec((th, dim), lambda i, kk: (kk, 0)),
        ],
        out_specs=pl.BlockSpec((tm, dim), lambda i, kk: (i, 0)),
        scratch_shapes=[pltpu.VMEM((tm, dim), jnp.bfloat16),
                        pltpu.VMEM((tm, dim), jnp.float32)],
        compiler_params=_cparams("parallel", "arbitrary"),
    )(h, norm_w, w13, w2)


# ------------------------- kernel 5: final rmsnorm + vocab projection (+bias) -------------------------

def _norm_logits_kernel(h_ref, nw_ref, w_ref, b_ref, o_ref, xn_sc, *, eps):
    j = pl.program_id(1)

    @pl.when(j == 0)
    def _():
        xf = h_ref[...].astype(jnp.float32)
        ms = jnp.mean(xf * xf, axis=-1, keepdims=True)
        xn_sc[...] = ((xf * lax.rsqrt(ms + eps)) * nw_ref[...]).astype(xn_sc.dtype)

    acc = jnp.dot(xn_sc[...], w_ref[...], preferred_element_type=jnp.float32)
    o_ref[...] = (acc + b_ref[...]).astype(o_ref.dtype)


def norm_logits(h, norm_w, out_w, out_b, eps):
    Tp, dim = h.shape
    vocab = out_w.shape[1]
    d = _tpu_defaults()
    tm = _pick_tile(Tp, d["row_t"], 16)
    tv = _pick_tile(vocab, d["col_t"], 128)
    return pl.pallas_call(
        functools.partial(_norm_logits_kernel, eps=eps),
        out_shape=jax.ShapeDtypeStruct((Tp, vocab), jnp.float32),
        grid=(Tp // tm, vocab // tv),
        in_specs=[
            pl.BlockSpec((tm, dim), lambda i, j: (i, 0)),
            pl.BlockSpec((1, dim), lambda i, j: (0, 0)),
            pl.BlockSpec((dim, tv), lambda i, j: (0, j)),
            pl.BlockSpec((1, tv), lambda i, j: (0, j)),
        ],
        out_specs=pl.BlockSpec((tm, tv), lambda i, j: (i, j)),
        scratch_shapes=[pltpu.VMEM((tm, dim), jnp.bfloat16)],
        compiler_params=_cparams("parallel", "arbitrary"),
    )(h, norm_w, out_w, out_b)


# ------------------------- model glue -------------------------

def precompute_freqs(head_dim, end, theta):
    inv = 1.0 / (theta ** (jnp.arange(0, head_dim, 2, dtype=jnp.float32) / head_dim))
    t = jnp.arange(end, dtype=jnp.float32)
    freqs = jnp.outer(t, inv)
    return jnp.cos(freqs), jnp.sin(freqs)


def _deinterleave_cols(w, n_heads, head_dim):
    # reorder columns within each head to [0,2,4,...,1,3,5,...] so RoPE becomes
    # a contiguous-half rotation in-kernel (scores are invariant to this permutation).
    perm = np.concatenate([np.arange(0, head_dim, 2), np.arange(1, head_dim, 2)])
    idx = np.concatenate([h * head_dim + perm for h in range(n_heads)])
    return w[:, idx]


def init_params(key, cfg):
    vocab, dim = cfg["vocab_size"], cfg["dim"]
    H, KVH, Dh = cfg["n_heads"], cfg["n_kv_heads"], cfg["head_dim"]
    hidden = cfg["hidden_dim"]
    scale = 0.1

    def nrm(k, shape):
        return scale * jax.random.normal(k, shape, dtype=jnp.float32)

    keys = jax.random.split(key, 3 + 7 * cfg["n_layers"])
    ki = iter(keys)
    layers = []
    for _ in range(cfg["n_layers"]):
        layers.append({
            "wq": nrm(next(ki), (dim, H * Dh)),
            "wk": nrm(next(ki), (dim, KVH * Dh)),
            "wv": nrm(next(ki), (dim, KVH * Dh)),
            "wo": nrm(next(ki), (H * Dh, dim)),
            "w1": nrm(next(ki), (dim, hidden)),
            "w2": nrm(next(ki), (hidden, dim)),
            "w3": nrm(next(ki), (dim, hidden)),
            "attn_norm": jnp.ones((dim,), jnp.float32),
            "ffn_norm": jnp.ones((dim,), jnp.float32),
        })
    rope_cos, rope_sin = precompute_freqs(Dh, cfg["max_pos"], cfg["rope_theta"])
    return {
        "emb": nrm(next(ki), (vocab, dim)),
        "layers": layers,
        "norm_w": jnp.ones((dim,), jnp.float32),
        "out_w": nrm(next(ki), (dim, vocab)),
        "out_b": nrm(next(ki), (vocab,)),
        "rope_cos": rope_cos,
        "rope_sin": rope_sin,
    }


def pack_params(raw, cfg):
    """Kernel-ready params: fused + RoPE-permuted + scale-folded QKV weight,
    tile-interleaved [w1|w3] weight, bf16 matmul weights."""
    H, KVH, Dh = cfg["n_heads"], cfg["n_kv_heads"], cfg["head_dim"]
    hidden = cfg["hidden_dim"]
    bf = jnp.bfloat16
    scale = Dh ** -0.5
    th = _ffn_hidden_tile(hidden)
    layers = []
    for lp in raw["layers"]:
        wq = _deinterleave_cols(lp["wq"] * scale, H, Dh)   # fold 1/sqrt(Dh) into wq
        wk = _deinterleave_cols(lp["wk"], KVH, Dh)
        wqkv = jnp.concatenate([wq, wk, lp["wv"]], axis=1).astype(bf)
        w13_parts = []
        for kk in range(hidden // th):
            w13_parts.append(lp["w1"][:, kk * th:(kk + 1) * th])
            w13_parts.append(lp["w3"][:, kk * th:(kk + 1) * th])
        w13 = jnp.concatenate(w13_parts, axis=1).astype(bf)
        layers.append({
            "wqkv": wqkv,
            "wo": lp["wo"].astype(bf),
            "w13": w13,
            "w2": lp["w2"].astype(bf),
            "attn_norm": lp["attn_norm"].reshape(1, -1),
            "ffn_norm": lp["ffn_norm"].reshape(1, -1),
        })
    return {
        "emb": raw["emb"],
        "layers": layers,
        "norm_w": raw["norm_w"].reshape(1, -1),
        "out_w": raw["out_w"].astype(bf),
        "out_b": raw["out_b"].reshape(1, -1),
        "rope_cos": raw["rope_cos"],
        "rope_sin": raw["rope_sin"],
    }


def transformer_forward(packed, input_ids, seqlens, cfg):
    dim = cfg["dim"]
    eps = cfg["norm_eps"]
    T = int(sum(seqlens))
    assert T == input_ids.shape[0]
    Tp = _round_up(max(T, 16), 16)

    # positions + per-row segment-start table; padded rows each form their own segment
    pos_list, start_list = [], []
    off = 0
    for s in seqlens:
        pos_list += list(range(s))
        start_list += [off] * s
        off += s
    pos_list += [0] * (Tp - T)
    start_list += list(range(T, Tp))
    positions = jnp.asarray(np.array(pos_list, dtype=np.int32))
    sstart = jnp.asarray(np.array(start_list, dtype=np.int32))
    sstart_col = sstart.reshape(Tp, 1)

    cos = packed["rope_cos"][positions]                 # (Tp, Dh/2)
    sin = packed["rope_sin"][positions]
    cc = jnp.concatenate([cos, cos], axis=-1)           # (Tp, Dh)  [c | c]
    ss = jnp.concatenate([-sin, sin], axis=-1)          # (Tp, Dh)  [-s | s]

    # TODO(synk): token-embedding gather stays in XLA (memory gather, not a compute hot path).
    h = packed["emb"][input_ids].astype(jnp.float32)
    if Tp > T:
        h = jnp.concatenate([h, jnp.zeros((Tp - T, dim), jnp.float32)], axis=0)
    # TODO(synk): residual stream kept in f32; bf16 would halve its HBM traffic but
    # shaves numerical margin against the f32 reference.

    for lp in packed["layers"]:
        qkv = norm_qkv_rope(h, lp["attn_norm"], lp["wqkv"], cc, ss, cfg)
        attn = flash_attention(qkv, sstart, sstart_col, cfg)
        h = wo_residual(attn, lp["wo"], h)
        h = norm_ffn_residual(h, lp["ffn_norm"], lp["w13"], lp["w2"], eps)

    logits = norm_logits(h, packed["norm_w"], packed["out_w"], packed["out_b"], eps)
    return logits[:T]


# ------------------------- pure-JAX reference (torch semantics) -------------------------

def reference_forward(raw, input_ids, seqlens, cfg):
    f32 = jnp.float32
    H, KVH, Dh = cfg["n_heads"], cfg["n_kv_heads"], cfg["head_dim"]
    eps = cfg["norm_eps"]
    rep = H // KVH
    T = int(input_ids.shape[0])

    def w(x):  # same bf16-rounded weight bits as the kernel path
        return x.astype(jnp.bfloat16).astype(f32)

    positions = np.concatenate([np.arange(s) for s in seqlens]).astype(np.int32)
    seg = np.concatenate([np.full(s, i, np.int32) for i, s in enumerate(seqlens)])
    cos = raw["rope_cos"][positions]
    sin = raw["rope_sin"][positions]

    def rms(x, wgt):
        ms = jnp.mean(x * x, axis=-1, keepdims=True)
        return (x * lax.rsqrt(ms + eps)) * wgt

    def rope(x):  # interleaved-pair RoPE (torch view_as_complex convention)
        xe = x[..., 0::2]
        xo = x[..., 1::2]
        oe = xe * cos[:, None, :] - xo * sin[:, None, :]
        oo = xe * sin[:, None, :] + xo * cos[:, None, :]
        return jnp.stack([oe, oo], axis=-1).reshape(x.shape)

    causal = np.arange(T)[None, :] <= np.arange(T)[:, None]
    mask = jnp.asarray((seg[:, None] == seg[None, :]) & causal)

    h = raw["emb"][input_ids].astype(f32)
    for lp in raw["layers"]:
        xn = rms(h, lp["attn_norm"])
        xq = rope((xn @ w(lp["wq"])).reshape(T, H, Dh))
        xk = rope((xn @ w(lp["wk"])).reshape(T, KVH, Dh))
        xv = (xn @ w(lp["wv"])).reshape(T, KVH, Dh)
        key = jnp.repeat(xk, rep, axis=1)
        val = jnp.repeat(xv, rep, axis=1)
        sc = jnp.einsum("qhd,khd->hqk", xq, key) * (Dh ** -0.5)
        sc = jnp.where(mask[None], sc, -jnp.inf)
        p = jax.nn.softmax(sc, axis=-1)
        o = jnp.einsum("hqk,khd->qhd", p, val).reshape(T, H * Dh)
        h = h + o @ w(lp["wo"])
        xn2 = rms(h, lp["ffn_norm"])
        g = jax.nn.silu(xn2 @ w(lp["w1"])) * (xn2 @ w(lp["w3"]))
        h = h + g @ w(lp["w2"])
    return rms(h, raw["norm_w"]) @ w(raw["out_w"]) + raw["out_b"]


# ------------------------- main -------------------------

if __name__ == "__main__":
    # Small but lane-realistic config (head_dim=128) so the tiled / fused-qkv
    # code paths are actually exercised.
    cfg = dict(
        vocab_size=512,
        dim=256,
        n_layers=2,
        n_heads=4,
        n_kv_heads=2,
        head_dim=128,
        hidden_dim=512,
        norm_eps=1e-5,
        rope_theta=10000.0,
        max_pos=64,
    )
    seqlens = [7, 5]
    T = sum(seqlens)

    root = jax.random.PRNGKey(0)
    k_param, k_ids = jax.random.split(root)
    raw = init_params(k_param, cfg)
    packed = pack_params(raw, cfg)
    input_ids = jax.random.randint(k_ids, (T,), 0, cfg["vocab_size"], dtype=jnp.int32)

    logits = transformer_forward(packed, input_ids, seqlens, cfg)
    logits = jax.block_until_ready(logits)

    assert logits.shape == (T, cfg["vocab_size"]), logits.shape
    assert logits.dtype == jnp.float32
    assert bool(jnp.all(jnp.isfinite(logits)))

    ref = jax.block_until_ready(reference_forward(raw, input_ids, seqlens, cfg))
    a = np.asarray(logits)
    b = np.asarray(ref)
    rel_fro = float(np.linalg.norm(a - b) / np.linalg.norm(b))
    assert rel_fro < 2.5e-2, f"relative error too large: {rel_fro}"
    np.testing.assert_allclose(a, b, rtol=5e-2, atol=1e-1)
    print("KERNEL_OK")
</pallas_src>

<mosaic_0001>
module attributes {stable_mosaic.version = 11 : i64} {
  func.func @_norm_qkv_rope_kernel(%arg0: i32, %arg1: i32, %arg2: memref<16x256xf32, #tpu.memory_space<vmem>>, %arg3: memref<1x256xf32, #tpu.memory_space<vmem>>, %arg4: memref<256x512xbf16, #tpu.memory_space<vmem>>, %arg5: memref<16x128xf32, #tpu.memory_space<vmem>>, %arg6: memref<16x128xf32, #tpu.memory_space<vmem>>, %arg7: memref<16x512xbf16, #tpu.memory_space<vmem>>, %arg8: memref<16x256xbf16, #tpu.memory_space<vmem>>) attributes {dimension_semantics = [#tpu.dimension_semantics<parallel>, #tpu.dimension_semantics<arbitrary>], iteration_bounds = array<i64: 1, 2>, scalar_prefetch = 0 : i64, scratch_operands = 1 : i64, tpu.core_type = #tpu.core_type<tc>, window_params = [{transform_indices = @transform_0, window_bounds = array<i64: 16, 256>}, {pipeline_mode = #tpu.pipeline_mode<synchronous>, transform_indices = @transform_1, window_bounds = array<i64: 1, 256>}, {transform_indices = @transform_2, window_bounds = array<i64: 256, 512>}, {transform_indices = @transform_3, window_bounds = array<i64: 16, 128>}, {transform_indices = @transform_4, window_bounds = array<i64: 16, 128>}, {transform_indices = @transform_5, window_bounds = array<i64: 16, 512>}]} {
    %c0_i32 = arith.constant 0 : i32
    %0 = arith.cmpi eq, %arg1, %c0_i32 : i32
    %1 = arith.extui %0 : i1 to i32
    %c0_i32_0 = arith.constant 0 : i32
    %2 = arith.cmpi ne, %1, %c0_i32_0 : i32
    scf.if %2 {
      %c0_10 = arith.constant 0 : index
      %c0_11 = arith.constant 0 : index
      %31 = vector.load %arg2[%c0_10, %c0_11] : memref<16x256xf32, #tpu.memory_space<vmem>>, vector<16x256xf32>
      %32 = arith.mulf %31, %31 : vector<16x256xf32>
      %cst_12 = arith.constant dense<0.000000e+00> : vector<16xf32>
      %33 = vector.multi_reduction <add>, %32, %cst_12 [1] : vector<16x256xf32> to vector<16xf32>
      %34 = vector.shape_cast %33 : vector<16xf32> to vector<16x1xf32>
      %cst_13 = arith.constant 2.560000e+02 : f32
      %35 = vector.broadcast %cst_13 : f32 to vector<16x1xf32>
      %36 = arith.divf %34, %35 : vector<16x1xf32>
      %cst_14 = arith.constant 9.99999974E-6 : f32
      %37 = vector.broadcast %cst_14 : f32 to vector<16x1xf32>
      %38 = arith.addf %36, %37 : vector<16x1xf32>
      %39 = math.rsqrt %38 : vector<16x1xf32>
      %40 = vector.broadcast %39 : vector<16x1xf32> to vector<16x256xf32>
      %41 = arith.mulf %31, %40 : vector<16x256xf32>
      %c0_15 = arith.constant 0 : index
      %c0_16 = arith.constant 0 : index
      %42 = vector.load %arg3[%c0_15, %c0_16] : memref<1x256xf32, #tpu.memory_space<vmem>>, vector<1x256xf32>
      %43 = vector.broadcast %42 : vector<1x256xf32> to vector<16x256xf32>
      %44 = arith.mulf %41, %43 : vector<16x256xf32>
      %45 = arith.truncf %44 : vector<16x256xf32> to vector<16x256xbf16>
      %c0_17 = arith.constant 0 : index
      %c0_18 = arith.constant 0 : index
      %46 = vector.load %arg8[%c0_17, %c0_18] : memref<16x256xbf16, #tpu.memory_space<vmem>>, vector<16x256xbf16>
      tpu.vector_store %arg8[%c0_17, %c0_18], %45 {strides = array<i32>} : memref<16x256xbf16, #tpu.memory_space<vmem>>, vector<16x256xbf16>,
    } else {
    }
    %c0 = arith.constant 0 : index
    %c0_1 = arith.constant 0 : index
    %3 = vector.load %arg8[%c0, %c0_1] : memref<16x256xbf16, #tpu.memory_space<vmem>>, vector<16x256xbf16>
    %c0_2 = arith.constant 0 : index
    %c0_3 = arith.constant 0 : index
    %4 = vector.load %arg4[%c0_2, %c0_3] : memref<256x512xbf16, #tpu.memory_space<vmem>>, vector<256x512xbf16>
    %cst = arith.constant dense<0.000000e+00> : vector<16x512xf32>
    %5 = tpu.matmul %3, %4, %cst {dimension_numbers = #tpu.dot_dimension_numbers<[1], [0], [0], [1], [0, 0, 1, 1], [], []>} : vector<16x256xbf16>, vector<256x512xbf16>, vector<16x512xf32> -> vector<16x512xf32>
    %c0_4 = arith.constant 0 : index
    %c0_5 = arith.constant 0 : index
    %6 = vector.load %arg5[%c0_4, %c0_5] : memref<16x128xf32, #tpu.memory_space<vmem>>, vector<16x128xf32>
    %c0_6 = arith.constant 0 : index
    %c0_7 = arith.constant 0 : index
    %7 = vector.load %arg6[%c0_6, %c0_7] : memref<16x128xf32, #tpu.memory_space<vmem>>, vector<16x128xf32>
    %8 = vector.extract_strided_slice %5 {offsets = [0, 0], sizes = [16, 64], strides = [1, 1]} : vector<16x512xf32> to vector<16x64xf32>
    %9 = vector.extract_strided_slice %5 {offsets = [0, 64], sizes = [16, 64], strides = [1, 1]} : vector<16x512xf32> to vector<16x64xf32>
    %10 = vector.extract_strided_slice %5 {offsets = [0, 128], sizes = [16, 64], strides = [1, 1]} : vector<16x512xf32> to vector<16x64xf32>
    %11 = vector.extract_strided_slice %5 {offsets = [0, 192], sizes = [16, 64], strides = [1, 1]} : vector<16x512xf32> to vector<16x64xf32>
    %12 = vector.extract_strided_slice %5 {offsets = [0, 256], sizes = [16, 64], strides = [1, 1]} : vector<16x512xf32> to vector<16x64xf32>
    %13 = vector.extract_strided_slice %5 {offsets = [0, 320], sizes = [16, 64], strides = [1, 1]} : vector<16x512xf32> to vector<16x64xf32>
    %14 = vector.extract_strided_slice %5 {offsets = [0, 384], sizes = [16, 64], strides = [1, 1]} : vector<16x512xf32> to vector<16x64xf32>
    %15 = vector.extract_strided_slice %5 {offsets = [0, 448], sizes = [16, 64], strides = [1, 1]} : vector<16x512xf32> to vector<16x64xf32>
    %16 = tpu.concatenate %9, %8, %11, %10, %13, %12, %15, %14 in 1 : vector<16x64xf32>, vector<16x64xf32>, vector<16x64xf32>, vector<16x64xf32>, vector<16x64xf32>, vector<16x64xf32>, vector<16x64xf32>, vector<16x64xf32> -> vector<16x512xf32>
    %17 = tpu.concatenate %6, %6, %6, %6 in 1 : vector<16x128xf32>, vector<16x128xf32>, vector<16x128xf32>, vector<16x128xf32> -> vector<16x512xf32>
    %18 = tpu.concatenate %7, %7, %7, %7 in 1 : vector<16x128xf32>, vector<16x128xf32>, vector<16x128xf32>, vector<16x128xf32> -> vector<16x512xf32>
    %19 = arith.mulf %5, %17 : vector<16x512xf32>
    %20 = arith.mulf %16, %18 : vector<16x512xf32>
    %21 = arith.addf %19, %20 : vector<16x512xf32>
    %22 = tpu.iota {dimensions = array<i32: 1>} : vector<16x512xi32>
    %c512_i32 = arith.constant 512 : i32
    %23 = arith.muli %arg1, %c512_i32 : i32
    %24 = vector.broadcast %23 : i32 to vector<16x512xi32>
    %25 = arith.addi %22, %24 : vector<16x512xi32>
    %c768_i32 = arith.constant 768 : i32
    %26 = vector.broadcast %c768_i32 : i32 to vector<16x512xi32>
    %27 = arith.cmpi slt, %25, %26 : vector<16x512xi32>
    %28 = arith.select %27, %21, %5 : vector<16x512xi1>, vector<16x512xf32>
    %29 = arith.truncf %28 : vector<16x512xf32> to vector<16x512xbf16>
    %c0_8 = arith.constant 0 : index
    %c0_9 = arith.constant 0 : index
    %30 = vector.load %arg7[%c0_8, %c0_9] : memref<16x512xbf16, #tpu.memory_space<vmem>>, vector<16x512xbf16>
    tpu.vector_store %arg7[%c0_8, %c0_9], %29 {strides = array<i32>} : memref<16x512xbf16, #tpu.memory_space<vmem>>, vector<16x512xbf16>,
    return
  }
  func.func @transform_0(%arg0: i32, %arg1: i32) -> (i32, i32) {
    %c0_i32 = arith.constant 0 : i32
    %c0_i32_0 = arith.constant 0 : i32
    return %arg0, %c0_i32 : i32, i32
  }
  func.func @transform_1(%arg0: i32, %arg1: i32) -> (i32, i32) {
    %c0_i32 = arith.constant 0 : i32
    %c0_i32_0 = arith.constant 0 : i32
    %c0_i32_1 = arith.constant 0 : i32
    return %c0_i32, %c0_i32_0 : i32, i32
  }
  func.func @transform_2(%arg0: i32, %arg1: i32) -> (i32, i32) {
    %c0_i32 = arith.constant 0 : i32
    %c0_i32_0 = arith.constant 0 : i32
    return %c0_i32, %arg1 : i32, i32
  }
  func.func @transform_3(%arg0: i32, %arg1: i32) -> (i32, i32) {
    %c0_i32 = arith.constant 0 : i32
    %c0_i32_0 = arith.constant 0 : i32
    return %arg0, %c0_i32 : i32, i32
  }
  func.func @transform_4(%arg0: i32, %arg1: i32) -> (i32, i32) {
    %c0_i32 = arith.constant 0 : i32
    %c0_i32_0 = arith.constant 0 : i32
    return %arg0, %c0_i32 : i32, i32
  }
  func.func @transform_5(%arg0: i32, %arg1: i32) -> (i32, i32) {
    %c0_i32 = arith.constant 0 : i32
    return %arg0, %arg1 : i32, i32
  }
}

</mosaic_0001>

<llo_original>
// kernel: tpu_custom_call.1
$region0: #{tpu_custom_call.1}
  #allocation0 [shape = 'u32[]', space=smem, size = 0x4, offset = 0x4, fixed_abs, tag = 'smem constant byte address 0x4 - core index']
  #allocation1 [shape = 'u32[144,128]{1,0:T(1,128)}', space=vmem, size = 0x12000, scoped, tag = 'internal scratch']
  #allocation2 [shape = 'bf16[16,256]{1,0:T(16,128)(2,1)}', space=vmem, size = 0x2000, scoped, tag = 'scratch operand']
  %s0 = inlined_call_operand.hbm [shape: f32[16,256], index: 0, kind: input, shape index: {}]
  %s1 = inlined_call_operand.vmem [shape: f32[1,256], index: 1, kind: input, shape index: {}]
  %s2 = inlined_call_operand.hbm [shape: bf16[256,1024], index: 2, kind: input, shape index: {}]
  %s3 = inlined_call_operand.hbm [shape: f32[16,128], index: 3, kind: input, shape index: {}]
  %s4 = inlined_call_operand.hbm [shape: f32[16,128], index: 4, kind: input, shape index: {}]
  %s5 = inlined_call_operand.hbm [shape: bf16[16,1024], index: 5, kind: output, shape index: {}]
  %s6 = sld [smem:[#allocation0]]
  $region73: #{tpu_custom_call.1} parent=0
    _
  %s8 = ssub.s32 1, %s6
  %s9 = scalar_select 0, %s8, %s6
  $region1: #{tpu_custom_call.1} parent=0
    #allocation3 [shape = 'u8[16384]{0}', space=vmem, size = 0x4000, scoped, tag = 'input window, operand 0, single buffered']
    #allocation4 [shape = 's32[2]{0}', space=sflag, size = 0x8, scoped, tag = 'scoped memory for tpu_custom_call.1']
    #allocation5 [shape = 's32[2]{0}', space=sflag, size = 0x8, scoped, tag = 'scoped memory for tpu_custom_call.1']
    #allocation6 [shape = 'u8[524288]{0}', space=vmem, size = 0x80000, scoped, tag = 'input window, operand 2']
    #allocation7 [shape = 's32[2]{0}', space=sflag, size = 0x8, scoped, tag = 'scoped memory for tpu_custom_call.1']
    #allocation8 [shape = 'u8[8192]{0}', space=vmem, size = 0x2000, scoped, tag = 'input window, operand 3, single buffered']
    #allocation9 [shape = 'u8[8192]{0}', space=vmem, size = 0x2000, scoped, tag = 'input window, operand 4, single buffered']
    #allocation10 [shape = 's32[1]{0}', space=sflag, size = 0x4, scoped, tag = 'scoped memory for tpu_custom_call.1']
    #allocation11 [shape = 'u8[32768]{0}', space=vmem, size = 0x8000, scoped, tag = 'output window, operand 0']
    %10 = vsyncpa [#allocation4], 0
    %11 = vsyncpa [#allocation7], 0
    %s12 = scalar_lea.sflag [#allocation7], 1
    %13 = vsyncpa %s12, 0
    %14 = vsyncpa [#allocation10], 0
    %15 = vsyncpa [#allocation5], 0
    %s16 = scalar_lea.sflag [#allocation5], 1
    %17 = vsyncpa %s16, 0
    loop: start=0, step=1, limit=4
    $region2: #{tpu_custom_call.1} parent=1 // loop_pre_header
      _
    $region3: #{tpu_custom_call.1} parent=1 // loop_header
      %s19 = sphi 0, %s23
      %p20 = scmp.ge.s32.totalorder %s19, 4
      %s26 = sphi 0, %s38
      %s27 = sphi 0, %s34
      %s28 = sphi 0, %s26
      %s29 = sphi 0, %s27
      %s30 = sphi 0, %s28
      %s31 = sphi 0, %s29
      %s41 = sphi 0, %s43
      %s44 = sphi 0, %s41
      %s45 = sphi 0, %s44
      %s61 = sphi 0, %s45
      %s65 = sphi 0, %s65
      %s67 = sphi 0, %s65
      %s68 = sphi 0, %s67
      %s82 = sphi 0, %s68
      %s88 = sphi 0, %s90
      %s91 = sphi 0, %s88
      %s92 = sphi 0, %s91
      %s108 = sphi 0, %s92
      %s114 = sphi 0, %s116
      %s117 = sphi 0, %s114
      %s118 = sphi 0, %s117
      %s134 = sphi 0, %s118
      %s140 = sphi 0, %s142
      %s143 = sphi 0, %s140
      %s144 = sphi 0, %s143
      %s160 = sphi 0, %s144
      %s168 = sphi 0, %s170
      %s171 = sphi 0, %s168
      %s172 = sphi 0, %s171
      %s188 = sphi 0, %s172
    $region4: #{tpu_custom_call.1} parent=1 // loop_header_branch
      %22 = sbr.rel (%p20) target = $region8
    $region5: #{tpu_custom_call.1} parent=1 // loop_body
      %s24 = ssub.s32 %s19, 1
      %s25 = ssub.s32 %s19, 2
      %s32 = sadd.s32 1, %s27
      %p33 = scmp.ge.s32.totalorder %s32, 2
      %s34 = scalar_select %p33, 0, %s32
      %s35 = sadd.s32 1, %s26
      %s36 = scalar_select %p33, %s35, %s26
      %p37 = scmp.ge.s32.totalorder %s36, 1
      %s38 = scalar_select %p37, 0, %s36
      %s39 = ssub.s32 %s26, %s38
      %p40 = scmp.eq.s32.totalorder %s39, 0
      %s42 = sadd.s32 %s41, 1
      %s43 = scalar_select %p40, %s41, %s42
      %p46 = pneg %p40
      %p47 = scmp.eq.s32.totalorder %s19, 1
      %p48 = por %p46, %p47
      %p49 = scmp.ne.s32.totalorder %s41, %s44
      %p50 = scmp.eq.s32.totalorder %s19, 0
      %p51 = por %p49, %p50
      %p52 = scmp.ne.s32.totalorder %s41, %s44
      %p53 = scmp.eq.s32.totalorder %s24, 1
      %p54 = por %p52, %p53
      %p55 = scmp.ne.s32.totalorder %s44, %s45
      %p56 = scmp.eq.s32.totalorder %s24, 0
      %p57 = por %p55, %p56
      %p58 = scmp.ne.s32.totalorder %s44, %s45
      %p59 = scmp.eq.s32.totalorder %s25, 1
      %p60 = por %p58, %p59
      %p62 = scmp.ne.s32.totalorder %s45, %s61
      %p63 = scmp.eq.s32.totalorder %s25, 0
      %p64 = por %p62, %p63
      %s66 = sadd.s32 %s65, 1
      %p69 = scmp.eq.s32.totalorder %s19, 1
      %p70 = scmp.ne.s32.totalorder %s65, %s67
      %p71 = scmp.eq.s32.totalorder %s19, 0
      %p72 = por %p70, %p71
      %p73 = scmp.ne.s32.totalorder %s65, %s67
      %p74 = scmp.eq.s32.totalorder %s24, 1
      %p75 = por %p73, %p74
      %p76 = scmp.ne.s32.totalorder %s67, %s68
      %p77 = scmp.eq.s32.totalorder %s24, 0
      %p78 = por %p76, %p77
      %p79 = scmp.ne.s32.totalorder %s67, %s68
      %p80 = scmp.eq.s32.totalorder %s25, 1
      %p81 = por %p79, %p80
      %p83 = scmp.ne.s32.totalorder %s68, %s82
      %p84 = scmp.eq.s32.totalorder %s25, 0
      %p85 = por %p83, %p84
      %s86 = ssub.s32 %s27, %s34
      %p87 = scmp.eq.s32.totalorder %s86, 0
      %s89 = sadd.s32 %s88, 1
      %s90 = scalar_select %p87, %s88, %s89
      %p93 = pneg %p87
      %p94 = scmp.eq.s32.totalorder %s19, 1
      %p95 = por %p93, %p94
      %p96 = scmp.ne.s32.totalorder %s88, %s91
      %p97 = scmp.eq.s32.totalorder %s19, 0
      %p98 = por %p96, %p97
      %p99 = scmp.ne.s32.totalorder %s88, %s91
      %p100 = scmp.eq.s32.totalorder %s24, 1
      %p101 = por %p99, %p100
      %p102 = scmp.ne.s32.totalorder %s91, %s92
      %p103 = scmp.eq.s32.totalorder %s24, 0
      %p104 = por %p102, %p103
      %p105 = scmp.ne.s32.totalorder %s91, %s92
      %p106 = scmp.eq.s32.totalorder %s25, 1
      %p107 = por %p105, %p106
      %p109 = scmp.ne.s32.totalorder %s92, %s108
      %p110 = scmp.eq.s32.totalorder %s25, 0
      %p111 = por %p109, %p110
      %s112 = ssub.s32 %s26, %s38
      %p113 = scmp.eq.s32.totalorder %s112, 0
      %s115 = sadd.s32 %s114, 1
      %s116 = scalar_select %p113, %s114, %s115
      %p119 = pneg %p113
      %p120 = scmp.eq.s32.totalorder %s19, 1
      %p121 = por %p119, %p120
      %p122 = scmp.ne.s32.totalorder %s114, %s117
      %p123 = scmp.eq.s32.totalorder %s19, 0
      %p124 = por %p122, %p123
      %p125 = scmp.ne.s32.totalorder %s114, %s117
      %p126 = scmp.eq.s32.totalorder %s24, 1
      %p127 = por %p125, %p126
      %p128 = scmp.ne.s32.totalorder %s117, %s118
      %p129 = scmp.eq.s32.totalorder %s24, 0
      %p130 = por %p128, %p129
      %p131 = scmp.ne.s32.totalorder %s117, %s118
      %p132 = scmp.eq.s32.totalorder %s25, 1
      %p133 = por %p131, %p132
      %p135 = scmp.ne.s32.totalorder %s118, %s134
      %p136 = scmp.eq.s32.totalorder %s25, 0
      %p137 = por %p135, %p136
      %s138 = ssub.s32 %s26, %s38
      %p139 = scmp.eq.s32.totalorder %s138, 0
      %s141 = sadd.s32 %s140, 1
      %s142 = scalar_select %p139, %s140, %s141
      %p145 = pneg %p139
      %p146 = scmp.eq.s32.totalorder %s19, 1
      %p147 = por %p145, %p146
      %p148 = scmp.ne.s32.totalorder %s140, %s143
      %p149 = scmp.eq.s32.totalorder %s19, 0
      %p150 = por %p148, %p149
      %p151 = scmp.ne.s32.totalorder %s140, %s143
      %p152 = scmp.eq.s32.totalorder %s24, 1
      %p153 = por %p151, %p152
      %p154 = scmp.ne.s32.totalorder %s143, %s144
      %p155 = scmp.eq.s32.totalorder %s24, 0
      %p156 = por %p154, %p155
      %p157 = scmp.ne.s32.totalorder %s143, %s144
      %p158 = scmp.eq.s32.totalorder %s25, 1
      %p159 = por %p157, %p158
      %p161 = scmp.ne.s32.totalorder %s144, %s160
      %p162 = scmp.eq.s32.totalorder %s25, 0
      %p163 = por %p161, %p162
      %s164 = ssub.s32 %s26, %s38
      %s165 = ssub.s32 %s27, %s34
      %s166 = sor.u32 %s164, %s165
      %p167 = scmp.eq.s32.totalorder %s166, 0
      %s169 = sadd.s32 %s168, 1
      %s170 = scalar_select %p167, %s168, %s169
      %p173 = pneg %p167
      %p174 = scmp.eq.s32.totalorder %s19, 1
      %p175 = por %p173, %p174
      %p176 = scmp.ne.s32.totalorder %s168, %s171
      %p177 = scmp.eq.s32.totalorder %s19, 0
      %p178 = por %p176, %p177
      %p179 = scmp.ne.s32.totalorder %s168, %s171
      %p180 = scmp.eq.s32.totalorder %s24, 1
      %p181 = por %p179, %p180
      %p182 = scmp.ne.s32.totalorder %s171, %s172
      %p183 = scmp.eq.s32.totalorder %s24, 0
      %p184 = por %p182, %p183
      %p185 = scmp.ne.s32.totalorder %s171, %s172
      %p186 = scmp.eq.s32.totalorder %s25, 1
      %p187 = por %p185, %p186
      %p189 = scmp.ne.s32.totalorder %s172, %s188
      %p190 = scmp.eq.s32.totalorder %s25, 0
      %p191 = por %p189, %p190
      %p192 = scmp.le.s32.totalorder 1, %s19
      %p193 = scmp.lt.s32.totalorder %s19, 3
      %p194 = pnand %p192, %p193
      %p195 = pneg %p194
      // Predicated region
      $region9: #{tpu_custom_call.1} parent=5 // pred_check
        _
      $region10: #{tpu_custom_call.1} parent=5 // pred_check_branch
        %197 = sbr.rel (%p194) target = $region12
      $region11: #{tpu_custom_call.1} parent=5 // pred_region
        %s198 = ssub.s32 %s19, 1
        // Predicated region
        $region13: #{tpu_custom_call.1} parent=11 // pred_check
          %p199 = pneg %p57
        $region14: #{tpu_custom_call.1} parent=11 // pred_check_branch
          %201 = sbr.rel (%p199) target = $region16
        $region15: #{tpu_custom_call.1} parent=11 // pred_region
          %s202 = smul.u32 2, %s28
          %s204 = ssub.s32 512, 512
          %205 = vsyncadd [#allocation4], %s204
          %s206 = smul.addr %s202, 2
          %s207 = smul.addr %s206, 128
          %s208 = scalar_lea.hbm %s0, %s207
          %s209 = sshll.u32 [#allocation3], 4
          %s210 = int_to_ptr.vmem [resolvable:$true] %s209
          %215 = dma.hbm_to_vmem [thread:$0]  %s208, 512, %s210, [#allocation4], 256, 256, 16
        $region16: #{tpu_custom_call.1} parent=11 // pred_fallthru
          _
        // Predicated region
        $region17: #{tpu_custom_call.1} parent=11 // pred_check
          %p216 = pneg %p78
        $region18: #{tpu_custom_call.1} parent=11 // pred_check_branch
          %218 = sbr.rel (%p216) target = $region20
        $region19: #{tpu_custom_call.1} parent=11 // pred_region
          _
        $region20: #{tpu_custom_call.1} parent=11 // pred_fallthru
          _
        // Predicated region
        $region21: #{tpu_custom_call.1} parent=11 // pred_check
          %p219 = pneg %p130
        $region22: #{tpu_custom_call.1} parent=11 // pred_check_branch
          %221 = sbr.rel (%p219) target = $region24
        $region23: #{tpu_custom_call.1} parent=11 // pred_region
          %s222 = smul.u32 2, %s28
          %s224 = ssub.s32 256, 256
          %225 = vsyncadd [#allocation7], %s224
          %s226 = smul.addr %s222, 128
          %s227 = scalar_lea.hbm %s3, %s226
          %s228 = sshll.u32 [#allocation8], 4
          %s229 = int_to_ptr.vmem [resolvable:$true] %s228
          %234 = dma.hbm_to_vmem [thread:$0]  %s227, 256, %s229, [#allocation7], 128, 128, 8
        $region24: #{tpu_custom_call.1} parent=11 // pred_fallthru
          _
        // Predicated region
        $region25: #{tpu_custom_call.1} parent=11 // pred_check
          %p235 = pneg %p156
        $region26: #{tpu_custom_call.1} parent=11 // pred_check_branch
          %237 = sbr.rel (%p235) target = $region28
        $region27: #{tpu_custom_call.1} parent=11 // pred_region
          %s238 = smul.u32 2, %s28
          %s240 = ssub.s32 256, 256
          %241 = vsyncadd [#allocation10], %s240
          %s242 = smul.addr %s238, 128
          %s243 = scalar_lea.hbm %s4, %s242
          %s244 = sshll.u32 [#allocation9], 4
          %s245 = int_to_ptr.vmem [resolvable:$true] %s244
          %250 = dma.hbm_to_vmem [thread:$0]  %s243, 256, %s245, [#allocation10], 128, 128, 8
        $region28: #{tpu_custom_call.1} parent=11 // pred_fallthru
          _
      $region12: #{tpu_custom_call.1} parent=5 // pred_fallthru
        _
      %p251 = scmp.lt.s32.totalorder %s19, 2
      // Predicated region
      $region29: #{tpu_custom_call.1} parent=5 // pred_check
        %p252 = pneg %p251
      $region30: #{tpu_custom_call.1} parent=5 // pred_check_branch
        %254 = sbr.rel (%p252) target = $region32
      $region31: #{tpu_custom_call.1} parent=5 // pred_region
        // Predicated region
        $region33: #{tpu_custom_call.1} parent=31 // pred_check
          %p255 = pneg %p98
        $region34: #{tpu_custom_call.1} parent=31 // pred_check_branch
          %257 = sbr.rel (%p255) target = $region36
        $region35: #{tpu_custom_call.1} parent=31 // pred_region
          %s258 = sand.u32 %s19, 1
          %s259 = scalar_lea.sflag [#allocation7], %s258
          %s260 = sand.u32 %s88, 1
          %s261 = smul.addr %s260, 512
          %s262 = scalar_lea.vmem [#allocation6], %s261
          %s263 = smul.u32 4, %s27
          %s265 = ssub.s32 8192, 8192
          %266 = vsyncadd %s259, %s265
          %s267 = smul.addr %s263, 64
          %s268 = scalar_lea.hbm %s2, %s267
          %s269 = sshll.u32 %s262, 4
          %s270 = int_to_ptr.vmem [resolvable:$true] %s269
          %275 = dma.hbm_to_vmem [thread:$0]  %s268, 8192, %s270, %s259, 512, 256, 16
        $region36: #{tpu_custom_call.1} parent=31 // pred_fallthru
          _
      $region32: #{tpu_custom_call.1} parent=5 // pred_fallthru
        _
      %p276 = scmp.le.s32.totalorder 1, %s19
      %p277 = scmp.lt.s32.totalorder %s19, 3
      %p278 = pnand %p276, %p277
      %p279 = pneg %p278
      // Predicated region
      $region37: #{tpu_custom_call.1} parent=5 // pred_check
        _
      $region38: #{tpu_custom_call.1} parent=5 // pred_check_branch
        %281 = sbr.rel (%p278) target = $region40
      $region39: #{tpu_custom_call.1} parent=5 // pred_region
        %s282 = ssub.s32 %s19, 1
        // Predicated region
        $region41: #{tpu_custom_call.1} parent=39 // pred_check
          %p283 = pneg %p57
        $region42: #{tpu_custom_call.1} parent=39 // pred_check_branch
          %285 = sbr.rel (%p283) target = $region44
        $region43: #{tpu_custom_call.1} parent=39 // pred_region
          %286 = dma.done [#allocation4], 512
        $region44: #{tpu_custom_call.1} parent=39 // pred_fallthru
          _
        %s287 = sand.u32 %s24, 1
        %s288 = scalar_lea.sflag [#allocation7], %s287
        %s289 = sand.u32 %s91, 1
        %s290 = smul.addr %s289, 512
        %s291 = scalar_lea.vmem [#allocation6], %s290
        // Predicated region
        $region45: #{tpu_custom_call.1} parent=39 // pred_check
          %p292 = pneg %p104
        $region46: #{tpu_custom_call.1} parent=39 // pred_check_branch
          %294 = sbr.rel (%p292) target = $region48
        $region47: #{tpu_custom_call.1} parent=39 // pred_region
          %295 = dma.done %s288, 8192
        $region48: #{tpu_custom_call.1} parent=39 // pred_fallthru
          _
        // Predicated region
        $region49: #{tpu_custom_call.1} parent=39 // pred_check
          %p296 = pneg %p130
        $region50: #{tpu_custom_call.1} parent=39 // pred_check_branch
          %298 = sbr.rel (%p296) target = $region52
        $region51: #{tpu_custom_call.1} parent=39 // pred_region
          %299 = dma.done [#allocation7], 256
        $region52: #{tpu_custom_call.1} parent=39 // pred_fallthru
          _
        // Predicated region
        $region53: #{tpu_custom_call.1} parent=39 // pred_check
          %p300 = pneg %p156
        $region54: #{tpu_custom_call.1} parent=39 // pred_check_branch
          %302 = sbr.rel (%p300) target = $region56
        $region55: #{tpu_custom_call.1} parent=39 // pred_region
          %303 = dma.done [#allocation10], 256
        $region56: #{tpu_custom_call.1} parent=39 // pred_fallthru
          _
        %p304 = pneg %p57
        %p305 = pneg %p54
        %p306 = pneg %p78
        %p307 = pneg %p75
        %s308 = sand.u32 %s24, 1
        %s309 = scalar_lea.sflag [#allocation7], %s308
        %s310 = sand.u32 %s91, 1
        %s311 = smul.addr %s310, 512
        %s312 = scalar_lea.vmem [#allocation6], %s311
        %p313 = pneg %p104
        %p314 = pneg %p101
        %p315 = pneg %p130
        %p316 = pneg %p127
        %p317 = pneg %p156
        %p318 = pneg %p153
        %p319 = pneg %p184
        %p320 = pneg %p181
        %s321 = sand.u32 %s171, 1
        %s322 = scalar_lea.sflag [#allocation5], %s321
        %s323 = sand.u32 %s171, 1
        %s324 = smul.addr %s323, 32
        %s325 = scalar_lea.vmem [#allocation11], %s324
        %s326 = smul.u32 2, %s28
        %s327 = smul.u32 4, %s29
        %s328 = smul.u32 2, %s28
        %s329 = smul.u32 2, %s28
        %s330 = smul.u32 2, %s28
        %s331 = smul.u32 4, %s29
        %p332 = scmp.eq.s32.totalorder %s29, 0
        // Predicated region
        $region57: #{tpu_custom_call.1} parent=39 // pred_check
          %p333 = pneg %p332
        $region58: #{tpu_custom_call.1} parent=39 // pred_check_branch
          %335 = sbr.rel (%p333) target = $region60
        $region59: #{tpu_custom_call.1} parent=39 // pred_region
          %v336 = vld [vmem:[#allocation3] sm:$0xff]
          %v337 = vld [vmem:[#allocation3 + $0x8] sm:$0xff]
          %v338 = vld [vmem:[#allocation3 + $0x10] sm:$0xff]
          %v339 = vld [vmem:[#allocation3 + $0x18] sm:$0xff]
          %v340 = vmul.f32 %v336, %v336
          %v341 = vmul.f32 %v337, %v337
          %v342 = vmul.f32 %v338, %v338
          %v343 = vmul.f32 %v339, %v339
          %v344 = vadd.f32 %v340, %v341
          %345 = vadd.xlane.f32.xlu0 %v344
          %v346 = vpop.xlane.xlu0 %345
          %v347 = vadd.f32 %v342, %v343
          %348 = vadd.xlane.f32.xlu0 %v347
          %v349 = vpop.xlane.xlu0 %348
          %v350 = vrcp.pop 256.0
          %v351 = vmul.f32 %v346, %v350
          %v352 = vmul.f32 %v349, %v350
          %v353 = vadd.f32 %v351, 1e-05
          %v354 = vadd.f32 %v352, 1e-05
          %v355 = vrsqrt.pop %v353
          %v356 = vrsqrt.pop %v354
          %v357 = vmul.f32 %v336, %v355
          %v358 = vmul.f32 %v337, %v355
          %v359 = vmul.f32 %v338, %v356
          %v360 = vmul.f32 %v339, %v356
          %v361 = vld [vmem:[%s1] sm:$0x3]
          %v363 = vlaneseq
          %v364 = vshrl.u32 %v363, 7
          %v365 = vsub.s32 0, %v364
          %v366 = vrot.slane %v361, %v365
          %v367 = vlaneseq
          %v368 = vshrl.u32 %v367, 7
          %v369 = vsub.s32 1, %v368
          %v370 = vrot.slane %v361, %v369
          %v373 = vmul.f32 %v357, %v366
          %v374 = vmul.f32 %v358, %v370
          %v375 = vmul.f32 %v359, %v366
          %v376 = vmul.f32 %v360, %v370
          %v377 = vpack.c.bf16 %v375, %v373
          %v378 = vpack.c.bf16 %v376, %v374
          %379 = vst [vmem:[#allocation2] sm:$0xff] %v377
          %380 = vst [vmem:[#allocation2 + $0x8] sm:$0xff] %v378
        $region60: #{tpu_custom_call.1} parent=39 // pred_fallthru
          _
        %v381 = vld [vmem:[#allocation2] sm:$0xff]
        %v382 = vld [vmem:[#allocation2 + $0x8] sm:$0xff]
        %v383 = vld [vmem:[%s291] sm:$0xff]
        %v384 = vld [vmem:[%s291 + $0x8] sm:$0xff]
        %v385 = vld [vmem:[%s291 + $0x10] sm:$0xff]
        %v386 = vld [vmem:[%s291 + $0x18] sm:$0xff]
        %v387 = vld [vmem:[%s291 + $0x20] sm:$0xff]
        %v388 = vld [vmem:[%s291 + $0x28] sm:$0xff]
        %v389 = vld [vmem:[%s291 + $0x30] sm:$0xff]
        %v390 = vld [vmem:[%s291 + $0x38] sm:$0xff]
        %v391 = vld [vmem:[%s291 + $0x40] sm:$0xff]
        %v392 = vld [vmem:[%s291 + $0x48] sm:$0xff]
        %v393 = vld [vmem:[%s291 + $0x50] sm:$0xff]
        %v394 = vld [vmem:[%s291 + $0x58] sm:$0xff]
        %v395 = vld [vmem:[%s291 + $0x60] sm:$0xff]
        %v396 = vld [vmem:[%s291 + $0x68] sm:$0xff]
        %v397 = vld [vmem:[%s291 + $0x70] sm:$0xff]
        %v398 = vld [vmem:[%s291 + $0x78] sm:$0xff]
        %v399 = vld [vmem:[%s291 + $0x80] sm:$0xff]
        %v400 = vld [vmem:[%s291 + $0x88] sm:$0xff]
        %v401 = vld [vmem:[%s291 + $0x90] sm:$0xff]
        %v402 = vld [vmem:[%s291 + $0x98] sm:$0xff]
        %v403 = vld [vmem:[%s291 + $0xa0] sm:$0xff]
        %v404 = vld [vmem:[%s291 + $0xa8] sm:$0xff]
        %v405 = vld [vmem:[%s291 + $0xb0] sm:$0xff]
        %v406 = vld [vmem:[%s291 + $0xb8] sm:$0xff]
        %v407 = vld [vmem:[%s291 + $0xc0] sm:$0xff]
        %v408 = vld [vmem:[%s291 + $0xc8] sm:$0xff]
        %v409 = vld [vmem:[%s291 + $0xd0] sm:$0xff]
        %v410 = vld [vmem:[%s291 + $0xd8] sm:$0xff]
        %v411 = vld [vmem:[%s291 + $0xe0] sm:$0xff]
        %v412 = vld [vmem:[%s291 + $0xe8] sm:$0xff]
        %v413 = vld [vmem:[%s291 + $0xf0] sm:$0xff]
        %v414 = vld [vmem:[%s291 + $0xf8] sm:$0xff]
        %v415 = vld [vmem:[%s291 + $0x100] sm:$0xff]
        %v416 = vld [vmem:[%s291 + $0x108] sm:$0xff]
        %v417 = vld [vmem:[%s291 + $0x110] sm:$0xff]
        %v418 = vld [vmem:[%s291 + $0x118] sm:$0xff]
        %v419 = vld [vmem:[%s291 + $0x120] sm:$0xff]
        %v420 = vld [vmem:[%s291 + $0x128] sm:$0xff]
        %v421 = vld [vmem:[%s291 + $0x130] sm:$0xff]
        %v422 = vld [vmem:[%s291 + $0x138] sm:$0xff]
        %v423 = vld [vmem:[%s291 + $0x140] sm:$0xff]
        %v424 = vld [vmem:[%s291 + $0x148] sm:$0xff]
        %v425 = vld [vmem:[%s291 + $0x150] sm:$0xff]
        %v426 = vld [vmem:[%s291 + $0x158] sm:$0xff]
        %v427 = vld [vmem:[%s291 + $0x160] sm:$0xff]
        %v428 = vld [vmem:[%s291 + $0x168] sm:$0xff]
        %v429 = vld [vmem:[%s291 + $0x170] sm:$0xff]
        %v430 = vld [vmem:[%s291 + $0x178] sm:$0xff]
        %v431 = vld [vmem:[%s291 + $0x180] sm:$0xff]
        %v432 = vld [vmem:[%s291 + $0x188] sm:$0xff]
        %v433 = vld [vmem:[%s291 + $0x190] sm:$0xff]
        %v434 = vld [vmem:[%s291 + $0x198] sm:$0xff]
        %v435 = vld [vmem:[%s291 + $0x1a0] sm:$0xff]
        %v436 = vld [vmem:[%s291 + $0x1a8] sm:$0xff]
        %v437 = vld [vmem:[%s291 + $0x1b0] sm:$0xff]
        %v438 = vld [vmem:[%s291 + $0x1b8] sm:$0xff]
        %v439 = vld [vmem:[%s291 + $0x1c0] sm:$0xff]
        %v440 = vld [vmem:[%s291 + $0x1c8] sm:$0xff]
        %v441 = vld [vmem:[%s291 + $0x1d0] sm:$0xff]
        %v442 = vld [vmem:[%s291 + $0x1d8] sm:$0xff]
        %v443 = vld [vmem:[%s291 + $0x1e0] sm:$0xff]
        %v444 = vld [vmem:[%s291 + $0x1e8] sm:$0xff]
        %v445 = vld [vmem:[%s291 + $0x1f0] sm:$0xff]
        %v446 = vld [vmem:[%s291 + $0x1f8] sm:$0xff]
        %v511 = vunpack.c.l.b16 %v383
        %v512 = vunpack.c.h.b16 %v383
        %v513 = vunpack.c.l.b16 %v384
        %v514 = vunpack.c.h.b16 %v384
        %v515 = vunpack.c.l.b16 %v385
        %v516 = vunpack.c.h.b16 %v385
        %v517 = vunpack.c.l.b16 %v386
        %v518 = vunpack.c.h.b16 %v386
        %v519 = vunpack.c.l.b16 %v387
        %v520 = vunpack.c.h.b16 %v387
        %v521 = vunpack.c.l.b16 %v388
        %v522 = vunpack.c.h.b16 %v388
        %v523 = vunpack.c.l.b16 %v389
        %v524 = vunpack.c.h.b16 %v389
        %v525 = vunpack.c.l.b16 %v390
        %v526 = vunpack.c.h.b16 %v390
        %v527 = vunpack.c.l.b16 %v391
        %v528 = vunpack.c.h.b16 %v391
        %v529 = vunpack.c.l.b16 %v392
        %v530 = vunpack.c.h.b16 %v392
        %v531 = vunpack.c.l.b16 %v393
        %v532 = vunpack.c.h.b16 %v393
        %v533 = vunpack.c.l.b16 %v394
        %v534 = vunpack.c.h.b16 %v394
        %v535 = vunpack.c.l.b16 %v395
        %v536 = vunpack.c.h.b16 %v395
        %v537 = vunpack.c.l.b16 %v396
        %v538 = vunpack.c.h.b16 %v396
        %v539 = vunpack.c.l.b16 %v397
        %v540 = vunpack.c.h.b16 %v397
        %v541 = vunpack.c.l.b16 %v398
        %v542 = vunpack.c.h.b16 %v398
        %v543 = vunpack.c.l.b16 %v399
        %v544 = vunpack.c.h.b16 %v399
        %v545 = vunpack.c.l.b16 %v400
        %v546 = vunpack.c.h.b16 %v400
        %v547 = vunpack.c.l.b16 %v401
        %v548 = vunpack.c.h.b16 %v401
        %v549 = vunpack.c.l.b16 %v402
        %v550 = vunpack.c.h.b16 %v402
        %v551 = vunpack.c.l.b16 %v403
        %v552 = vunpack.c.h.b16 %v403
        %v553 = vunpack.c.l.b16 %v404
        %v554 = vunpack.c.h.b16 %v404
        %v555 = vunpack.c.l.b16 %v405
        %v556 = vunpack.c.h.b16 %v405
        %v557 = vunpack.c.l.b16 %v406
        %v558 = vunpack.c.h.b16 %v406
        %v559 = vunpack.c.l.b16 %v407
        %v560 = vunpack.c.h.b16 %v407
        %v561 = vunpack.c.l.b16 %v408
        %v562 = vunpack.c.h.b16 %v408
        %v563 = vunpack.c.l.b16 %v409
        %v564 = vunpack.c.h.b16 %v409
        %v565 = vunpack.c.l.b16 %v410
        %v566 = vunpack.c.h.b16 %v410
        %v567 = vunpack.c.l.b16 %v411
        %v568 = vunpack.c.h.b16 %v411
        %v569 = vunpack.c.l.b16 %v412
        %v570 = vunpack.c.h.b16 %v412
        %v571 = vunpack.c.l.b16 %v413
        %v572 = vunpack.c.h.b16 %v413
        %v573 = vunpack.c.l.b16 %v414
        %v574 = vunpack.c.h.b16 %v414
        %v575 = vunpack.c.l.b16 %v415
        %v576 = vunpack.c.h.b16 %v415
        %v577 = vunpack.c.l.b16 %v416
        %v578 = vunpack.c.h.b16 %v416
        %v579 = vunpack.c.l.b16 %v417
        %v580 = vunpack.c.h.b16 %v417
        %v581 = vunpack.c.l.b16 %v418
        %v582 = vunpack.c.h.b16 %v418
        %v583 = vunpack.c.l.b16 %v419
        %v584 = vunpack.c.h.b16 %v419
        %v585 = vunpack.c.l.b16 %v420
        %v586 = vunpack.c.h.b16 %v420
        %v587 = vunpack.c.l.b16 %v421
        %v588 = vunpack.c.h.b16 %v421
        %v589 = vunpack.c.l.b16 %v422
        %v590 = vunpack.c.h.b16 %v422
        %v591 = vunpack.c.l.b16 %v423
        %v592 = vunpack.c.h.b16 %v423
        %v593 = vunpack.c.l.b16 %v424
        %v594 = vunpack.c.h.b16 %v424
        %v595 = vunpack.c.l.b16 %v425
        %v596 = vunpack.c.h.b16 %v425
        %v597 = vunpack.c.l.b16 %v426
        %v598 = vunpack.c.h.b16 %v426
        %v599 = vunpack.c.l.b16 %v427
        %v600 = vunpack.c.h.b16 %v427
        %v601 = vunpack.c.l.b16 %v428
        %v602 = vunpack.c.h.b16 %v428
        %v603 = vunpack.c.l.b16 %v429
        %v604 = vunpack.c.h.b16 %v429
        %v605 = vunpack.c.l.b16 %v430
        %v606 = vunpack.c.h.b16 %v430
        %v607 = vunpack.c.l.b16 %v431
        %v608 = vunpack.c.h.b16 %v431
        %v609 = vunpack.c.l.b16 %v432
        %v610 = vunpack.c.h.b16 %v432
        %v611 = vunpack.c.l.b16 %v433
        %v612 = vunpack.c.h.b16 %v433
        %v613 = vunpack.c.l.b16 %v434
        %v614 = vunpack.c.h.b16 %v434
        %v615 = vunpack.c.l.b16 %v435
        %v616 = vunpack.c.h.b16 %v435
        %v617 = vunpack.c.l.b16 %v436
        %v618 = vunpack.c.h.b16 %v436
        %v619 = vunpack.c.l.b16 %v437
        %v620 = vunpack.c.h.b16 %v437
        %v621 = vunpack.c.l.b16 %v438
        %v622 = vunpack.c.h.b16 %v438
        %v623 = vunpack.c.l.b16 %v439
        %v624 = vunpack.c.h.b16 %v439
        %v625 = vunpack.c.l.b16 %v440
        %v626 = vunpack.c.h.b16 %v440
        %v627 = vunpack.c.l.b16 %v441
        %v628 = vunpack.c.h.b16 %v441
        %v629 = vunpack.c.l.b16 %v442
        %v630 = vunpack.c.h.b16 %v442
        %v631 = vunpack.c.l.b16 %v443
        %v632 = vunpack.c.h.b16 %v443
        %v633 = vunpack.c.l.b16 %v444
        %v634 = vunpack.c.h.b16 %v444
        %v635 = vunpack.c.l.b16 %v445
        %v636 = vunpack.c.h.b16 %v445
        %v637 = vunpack.c.l.b16 %v446
        %v638 = vunpack.c.h.b16 %v446
        %v639 = vpack.c.b16 %v515, %v511
        %v640 = vpack.c.b16 %v516, %v512
        %v641 = vpack.c.b16 %v517, %v513
        %v642 = vpack.c.b16 %v518, %v514
        %v643 = vpack.c.b16 %v523, %v519
        %v644 = vpack.c.b16 %v524, %v520
        %v645 = vpack.c.b16 %v525, %v521
        %v646 = vpack.c.b16 %v526, %v522
        %v647 = vpack.c.b16 %v531, %v527
        %v648 = vpack.c.b16 %v532, %v528
        %v649 = vpack.c.b16 %v533, %v529
        %v650 = vpack.c.b16 %v534, %v530
        %v651 = vpack.c.b16 %v539, %v535
        %v652 = vpack.c.b16 %v540, %v536
        %v653 = vpack.c.b16 %v541, %v537
        %v654 = vpack.c.b16 %v542, %v538
        %v655 = vpack.c.b16 %v547, %v543
        %v656 = vpack.c.b16 %v548, %v544
        %v657 = vpack.c.b16 %v549, %v545
        %v658 = vpack.c.b16 %v550, %v546
        %v659 = vpack.c.b16 %v555, %v551
        %v660 = vpack.c.b16 %v556, %v552
        %v661 = vpack.c.b16 %v557, %v553
        %v662 = vpack.c.b16 %v558, %v554
        %v663 = vpack.c.b16 %v563, %v559
        %v664 = vpack.c.b16 %v564, %v560
        %v665 = vpack.c.b16 %v565, %v561
        %v666 = vpack.c.b16 %v566, %v562
        %v667 = vpack.c.b16 %v571, %v567
        %v668 = vpack.c.b16 %v572, %v568
        %v669 = vpack.c.b16 %v573, %v569
        %v670 = vpack.c.b16 %v574, %v570
        %v671 = vpack.c.b16 %v579, %v575
        %v672 = vpack.c.b16 %v580, %v576
        %v673 = vpack.c.b16 %v581, %v577
        %v674 = vpack.c.b16 %v582, %v578
        %v675 = vpack.c.b16 %v587, %v583
        %v676 = vpack.c.b16 %v588, %v584
        %v677 = vpack.c.b16 %v589, %v585
        %v678 = vpack.c.b16 %v590, %v586
        %v679 = vpack.c.b16 %v595, %v591
        %v680 = vpack.c.b16 %v596, %v592
        %v681 = vpack.c.b16 %v597, %v593
        %v682 = vpack.c.b16 %v598, %v594
        %v683 = vpack.c.b16 %v603, %v599
        %v684 = vpack.c.b16 %v604, %v600
        %v685 = vpack.c.b16 %v605, %v601
        %v686 = vpack.c.b16 %v606, %v602
        %v687 = vpack.c.b16 %v611, %v607
        %v688 = vpack.c.b16 %v612, %v608
        %v689 = vpack.c.b16 %v613, %v609
        %v690 = vpack.c.b16 %v614, %v610
        %v691 = vpack.c.b16 %v619, %v615
        %v692 = vpack.c.b16 %v620, %v616
        %v693 = vpack.c.b16 %v621, %v617
        %v694 = vpack.c.b16 %v622, %v618
        %v695 = vpack.c.b16 %v627, %v623
        %v696 = vpack.c.b16 %v628, %v624
        %v697 = vpack.c.b16 %v629, %v625
        %v698 = vpack.c.b16 %v630, %v626
        %v699 = vpack.c.b16 %v635, %v631
        %v700 = vpack.c.b16 %v636, %v632
        %v701 = vpack.c.b16 %v637, %v633
        %v702 = vpack.c.b16 %v638, %v634
        %767 = vmatprep.subr.bf16.mxu0 %v640
        %768 = vmatpush1.bf16.msra.mxu0 %v639
        %769 = vmatprep.subr.bf16.mxu0 %v644
        %770 = vmatpush1.bf16.msra.mxu0 %v643
        %771 = vmatprep.subr.bf16.mxu0 %v648
        %772 = vmatpush1.bf16.msra.mxu0 %v647
        %773 = vmatprep.subr.bf16.mxu0 %v652
        %774 = vmatpush1.bf16.msra.mxu0 %v651
        %775 = vmatprep.subr.bf16.mxu0 %v656
        %776 = vmatpush1.bf16.msra.mxu0 %v655
        %777 = vmatprep.subr.bf16.mxu0 %v660
        %778 = vmatpush1.bf16.msra.mxu0 %v659
        %779 = vmatprep.subr.bf16.mxu0 %v664
        %780 = vmatpush1.bf16.msra.mxu0 %v663
        %781 = vmatprep.subr.bf16.mxu0 %v668
        %782 = vmatpush1.bf16.msra.mxu0 %v667
        %783 = vmatprep.subr.bf16.mxu0 %v672
        %784 = vmatpush1.bf16.msra.mxu0 %v671
        %785 = vmatprep.subr.bf16.mxu0 %v676
        %786 = vmatpush1.bf16.msra.mxu0 %v675
        %787 = vmatprep.subr.bf16.mxu0 %v680
        %788 = vmatpush1.bf16.msra.mxu0 %v679
        %789 = vmatprep.subr.bf16.mxu0 %v684
        %790 = vmatpush1.bf16.msra.mxu0 %v683
        %791 = vmatprep.subr.bf16.mxu0 %v688
        %792 = vmatpush1.bf16.msra.mxu0 %v687
        %793 = vmatprep.subr.bf16.mxu0 %v692
        %794 = vmatpush1.bf16.msra.mxu0 %v691
        %795 = vmatprep.subr.bf16.mxu0 %v696
        %796 = vmatpush1.bf16.msra.mxu0 %v695
        %797 = vmatprep.subr.bf16.mxu0 %v700
        %798 = vmatpush1.bf16.msra.mxu0 %v699
        %799 = vmatprep.mubr.bf16.mxu0 %v382
        %800 = vmatmul.mubr.bf16.gmra.mrb[0].mxu0 %v381
        %v801 = vpop.f32.mrb[0].mxu0
        %v802 = vadd.f32 0.0, %v801
        %v803 = vpop.f32.mrb[0].mxu0
        %v804 = vadd.f32 0.0, %v803
        %v805 = vpop.f32.mrb[0].mxu0
        %v806 = vadd.f32 0.0, %v805
        %v807 = vpop.f32.mrb[0].mxu0
        %v808 = vadd.f32 0.0, %v807
        %809 = vdwg.mxu0
        %810 = vmatprep.subr.bf16.mxu0 %v642
        %811 = vmatpush1.bf16.msra.mxu0 %v641
        %812 = vmatprep.subr.bf16.mxu0 %v646
        %813 = vmatpush1.bf16.msra.mxu0 %v645
        %814 = vmatprep.subr.bf16.mxu0 %v650
        %815 = vmatpush1.bf16.msra.mxu0 %v649
        %816 = vmatprep.subr.bf16.mxu0 %v654
        %817 = vmatpush1.bf16.msra.mxu0 %v653
        %818 = vmatprep.subr.bf16.mxu0 %v658
        %819 = vmatpush1.bf16.msra.mxu0 %v657
        %820 = vmatprep.subr.bf16.mxu0 %v662
        %821 = vmatpush1.bf16.msra.mxu0 %v661
        %822 = vmatprep.subr.bf16.mxu0 %v666
        %823 = vmatpush1.bf16.msra.mxu0 %v665
        %824 = vmatprep.subr.bf16.mxu0 %v670
        %825 = vmatpush1.bf16.msra.mxu0 %v669
        %826 = vmatprep.subr.bf16.mxu0 %v674
        %827 = vmatpush1.bf16.msra.mxu0 %v673
        %828 = vmatprep.subr.bf16.mxu0 %v678
        %829 = vmatpush1.bf16.msra.mxu0 %v677
        %830 = vmatprep.subr.bf16.mxu0 %v682
        %831 = vmatpush1.bf16.msra.mxu0 %v681
        %832 = vmatprep.subr.bf16.mxu0 %v686
        %833 = vmatpush1.bf16.msra.mxu0 %v685
        %834 = vmatprep.subr.bf16.mxu0 %v690
        %835 = vmatpush1.bf16.msra.mxu0 %v689
        %836 = vmatprep.subr.bf16.mxu0 %v694
        %837 = vmatpush1.bf16.msra.mxu0 %v693
        %838 = vmatprep.subr.bf16.mxu0 %v698
        %839 = vmatpush1.bf16.msra.mxu0 %v697
        %840 = vmatprep.subr.bf16.mxu0 %v702
        %841 = vmatpush1.bf16.msra.mxu0 %v701
        %842 = vmatprep.mubr.bf16.mxu0 %v382
        %843 = vmatmul.mubr.bf16.gmra.mrb[0].mxu0 %v381
        %v844 = vpop.f32.mrb[0].mxu0
        %v845 = vadd.f32 0.0, %v844
        %v846 = vpop.f32.mrb[0].mxu0
        %v847 = vadd.f32 0.0, %v846
        %v848 = vpop.f32.mrb[0].mxu0
        %v849 = vadd.f32 0.0, %v848
        %v850 = vpop.f32.mrb[0].mxu0
        %v851 = vadd.f32 0.0, %v850
        %852 = vdwg.mxu0
        %v853 = vld [vmem:[#allocation8] sm:$0xff]
        %v854 = vld [vmem:[#allocation8 + $0x8] sm:$0xff]
        %v855 = vld [vmem:[#allocation9] sm:$0xff]
        %v856 = vld [vmem:[#allocation9 + $0x8] sm:$0xff]
        %859 = vrot.lane.b32.xlu0 %v802, 64
        %v860 = vpop.permute.xlu0 %859
        %861 = vrot.lane.b32.xlu0 %v806, 64
        %v862 = vpop.permute.xlu0 %861
        %867 = vrot.lane.b32.xlu0 %v804, 64
        %v868 = vpop.permute.xlu0 %867
        %869 = vrot.lane.b32.xlu0 %v808, 64
        %v870 = vpop.permute.xlu0 %869
        %875 = vrot.lane.b32.xlu0 %v845, 64
        %v876 = vpop.permute.xlu0 %875
        %877 = vrot.lane.b32.xlu0 %v849, 64
        %v878 = vpop.permute.xlu0 %877
        %883 = vrot.lane.b32.xlu0 %v847, 64
        %v884 = vpop.permute.xlu0 %883
        %885 = vrot.lane.b32.xlu0 %v851, 64
        %v886 = vpop.permute.xlu0 %885
        %v889 = vmul.f32 %v802, %v853
        %v890 = vmul.f32 %v804, %v853
        %v891 = vmul.f32 %v845, %v853
        %v892 = vmul.f32 %v847, %v853
        %v893 = vmul.f32 %v806, %v854
        %v894 = vmul.f32 %v808, %v854
        %v895 = vmul.f32 %v849, %v854
        %v896 = vmul.f32 %v851, %v854
        %v897 = vmul.f32 %v860, %v855
        %v898 = vmul.f32 %v868, %v855
        %v899 = vmul.f32 %v876, %v855
        %v900 = vmul.f32 %v884, %v855
        %v901 = vmul.f32 %v862, %v856
        %v902 = vmul.f32 %v870, %v856
        %v903 = vmul.f32 %v878, %v856
        %v904 = vmul.f32 %v886, %v856
        %v905 = vadd.f32 %v889, %v897
        %v906 = vadd.f32 %v890, %v898
        %v907 = vadd.f32 %v891, %v899
        %v908 = vadd.f32 %v892, %v900
        %v909 = vadd.f32 %v893, %v901
        %v910 = vadd.f32 %v894, %v902
        %v911 = vadd.f32 %v895, %v903
        %v912 = vadd.f32 %v896, %v904
        %v913 = vlaneseq
        %v914 = vand.u32 %v913, 127
        %v915 = vadd.s32 %v914, 128
        %v916 = vadd.s32 %v914, 256
        %v917 = vadd.s32 %v914, 384
        %s918 = smul.u32 %s29, 512
        %v919 = vstv %s918
        %v920 = vadd.s32 %v914, %v919
        %v921 = vadd.s32 %v915, %v919
        %v922 = vadd.s32 %v916, %v919
        %v923 = vadd.s32 %v917, %v919
        %vm924 = vcmp.lt.s32.totalorder %v920, 768
        %vm925 = vcmp.lt.s32.totalorder %v921, 768
        %vm926 = vcmp.lt.s32.totalorder %v922, 768
        %vm927 = vcmp.lt.s32.totalorder %v923, 768
        %v928 = vsel %vm924, %v905, %v802
        %v929 = vsel %vm925, %v906, %v804
        %v930 = vsel %vm926, %v907, %v845
        %v931 = vsel %vm927, %v908, %v847
        %v932 = vsel %vm924, %v909, %v806
        %v933 = vsel %vm925, %v910, %v808
        %v934 = vsel %vm926, %v911, %v849
        %v935 = vsel %vm927, %v912, %v851
        %v936 = vpack.c.bf16 %v932, %v928
        %v937 = vpack.c.bf16 %v933, %v929
        %v938 = vpack.c.bf16 %v934, %v930
        %v939 = vpack.c.bf16 %v935, %v931
        %v944 = vunpack.c.l.b16 %v936
        %v945 = vunpack.c.l.b16 %v937
        %v946 = vunpack.c.l.b16 %v938
        %v947 = vunpack.c.l.b16 %v939
        %v948 = vunpack.c.h.b16 %v936
        %v949 = vunpack.c.h.b16 %v937
        %v950 = vunpack.c.h.b16 %v938
        %v951 = vunpack.c.h.b16 %v939
        %v952 = vpack.c.b16 %v945, %v944
        %v953 = vpack.c.b16 %v947, %v946
        %v954 = vpack.c.b16 %v949, %v948
        %v955 = vpack.c.b16 %v951, %v950
        %960 = vst [vmem:[%s325] sm:$0xff] %v952
        %961 = vst [vmem:[%s325 + $0x8] sm:$0xff] %v953
        %962 = vst [vmem:[%s325 + $0x10] sm:$0xff] %v954
        %963 = vst [vmem:[%s325 + $0x18] sm:$0xff] %v955
        %s964 = sand.u32 %s171, 1
        %s965 = scalar_lea.sflag [#allocation5], %s964
        %s966 = sand.u32 %s171, 1
        %s967 = smul.addr %s966, 32
        %s968 = scalar_lea.vmem [#allocation11], %s967
        // Predicated region
        $region61: #{tpu_custom_call.1} parent=39 // pred_check
          %p969 = pneg %p181
        $region62: #{tpu_custom_call.1} parent=39 // pred_check_branch
          %971 = sbr.rel (%p969) target = $region64
        $region63: #{tpu_custom_call.1} parent=39 // pred_region
          %s972 = smul.u32 2, %s28
          %s973 = smul.u32 4, %s29
          %s975 = ssub.s32 512, 512
          %976 = vsyncadd %s965, %s975
          %s977 = smul.addr %s972, 8
          %s978 = sadd.s32 %s973, %s977
          %s979 = smul.addr %s978, 64
          %s980 = scalar_lea.hbm %s5, %s979
          %s981 = sshll.u32 %s968, 4
          %s982 = int_to_ptr.vmem [resolvable:$true] %s981
          %987 = dma.vmem_to_hbm [thread:$0]  %s982, 512, %s980, %s965, 256, 512, 16
        $region64: #{tpu_custom_call.1} parent=39 // pred_fallthru
          _
      $region40: #{tpu_custom_call.1} parent=5 // pred_fallthru
        _
      %p988 = scmp.le.s32.totalorder 2, %s19
      // Predicated region
      $region65: #{tpu_custom_call.1} parent=5 // pred_check
        %p989 = pneg %p988
      $region66: #{tpu_custom_call.1} parent=5 // pred_check_branch
        %991 = sbr.rel (%p989) target = $region68
      $region67: #{tpu_custom_call.1} parent=5 // pred_region
        %s992 = ssub.s32 %s19, 2
        // Predicated region
        $region69: #{tpu_custom_call.1} parent=67 // pred_check
          %p993 = pneg %p187
        $region70: #{tpu_custom_call.1} parent=67 // pred_check_branch
          %995 = sbr.rel (%p993) target = $region72
        $region71: #{tpu_custom_call.1} parent=67 // pred_region
          %s996 = sand.u32 %s172, 1
          %s997 = scalar_lea.sflag [#allocation5], %s996
          %s998 = sand.u32 %s172, 1
          %s999 = smul.addr %s998, 32
          %s1000 = scalar_lea.vmem [#allocation11], %s999
          %1001 = dma.done %s997, 512
        $region72: #{tpu_custom_call.1} parent=67 // pred_fallthru
          _
      $region68: #{tpu_custom_call.1} parent=5 // pred_fallthru
        _
    $region6: #{tpu_custom_call.1} parent=1 // loop_footer
      %s23 = sadd.s32 1, %s19
    $region7: #{tpu_custom_call.1} parent=1 // loop_footer_branch
      %18 = sbr.rel target = $region3
    $region8: #{tpu_custom_call.1} parent=1 // loop_exit
      _
    %1002 = vsyncpa [#allocation4], 1
    %s1003 = scalar_lea.sflag [#allocation4], 1
    %1004 = vsyncpa %s1003, 1
    %1005 = vsyncpa [#allocation7], 1
    %s1006 = scalar_lea.sflag [#allocation7], 1
    %1007 = vsyncpa %s1006, 1
    %1008 = vsyncpa [#allocation10], 1
    %1009 = vsyncpa [#allocation5], 1
    %s1010 = scalar_lea.sflag [#allocation5], 1
    %1011 = vsyncpa %s1010, 1

</llo_original>
